<compile_context>
chip_gen: v5e
topology: v5e:2x2
jax: 0.10.0
libtpu: 0.0.40
codegen_flags: <defaults>
</compile_context>

<pallas_src>
import math

import jax
import jax.numpy as jnp
from jax.experimental import pallas as pl
from jax.experimental.pallas import tpu as pltpu

_INV_SQRT2 = 1.0 / math.sqrt(2.0)


def _round_up(v, m):
    return (v + m - 1) // m * m


def mlp_kernel(x_ref, w1_ref, b1_ref, w2_ref, b2_ref, o_ref):
    # ---- input layer: x @ W1 + b1 (MXU, f32 accumulation) ----
    h = jnp.dot(x_ref[...], w1_ref[...],
                preferred_element_type=jnp.float32) + b1_ref[...]

    # ---- hidden activation: exact GELU (erf form, matches nn.GELU default) ----
    h = 0.5 * h * (1.0 + jax.lax.erf(h * _INV_SQRT2))

    # ---- output layer: h @ W2 + b2 (MXU, f32 accumulation) ----
    z = jnp.dot(h.astype(w2_ref.dtype), w2_ref[...],
                preferred_element_type=jnp.float32) + b2_ref[...]

    # ---- output activation: softmax over dim=1 (feature/lane axis) ----
    # Padded logit columns carry a -1e30 bias -> exp underflows to 0 exactly.
    z = z - jnp.max(z, axis=-1, keepdims=True)
    e = jnp.exp(z)
    inv_l = pl.reciprocal(jnp.sum(e, axis=-1, keepdims=True), approx=True)
    o_ref[...] = (e * inv_l).astype(o_ref.dtype)


def mlp_forward(x, w1, b1, w2, b2, *, block_b=512, matmul_dtype=None):
    """x: [B, in_dim]; w1: [in_dim, hid]; b1: [1, hid]; w2: [hid, out]; b2: [1, out].

    matmul_dtype: optional dtype (e.g. jnp.bfloat16) for the MXU operands on
    v6e/v7x; accumulation and elementwise math remain float32.
    """
    B, in_dim = x.shape
    hid_dim = w1.shape[1]
    out_dim = w2.shape[1]
    f32 = jnp.float32
    mm_dtype = f32 if matmul_dtype is None else matmul_dtype

    # ---- pad feature dims to 128 (lane-dense stores, MXU-aligned matmuls) ----
    in_p = _round_up(in_dim, 128)
    hid_p = _round_up(hid_dim, 128)
    out_p = _round_up(out_dim, 128)

    # ---- batch tile: multiple of 8 sublanes, capped at block_b ----
    tb = min(_round_up(B, 8), _round_up(block_b, 8))
    b_p = _round_up(B, tb)

    # Zero padding is exact for the matmuls; padded hidden columns give GELU(0)=0
    # and padded output columns are killed by the -1e30 bias before softmax.
    x_p = jnp.zeros((b_p, in_p), f32).at[:B, :in_dim].set(x.astype(f32)).astype(mm_dtype)
    w1_p = jnp.zeros((in_p, hid_p), f32).at[:in_dim, :hid_dim].set(w1).astype(mm_dtype)
    b1_p = jnp.zeros((1, hid_p), f32).at[:, :hid_dim].set(b1)
    w2_p = jnp.zeros((hid_p, out_p), f32).at[:hid_dim, :out_dim].set(w2).astype(mm_dtype)
    b2_p = jnp.full((1, out_p), -1e30, f32).at[:, :out_dim].set(b2)

    grid = (b_p // tb,)

    # ---- explicit VMEM budget: resident weights + double-buffered x/o tiles ----
    def nbytes(n, d):
        return n * jnp.dtype(d).itemsize

    vmem = 2 * (nbytes(in_p * hid_p, mm_dtype) + nbytes(hid_p * out_p, mm_dtype)
                + nbytes(hid_p, f32) + nbytes(out_p, f32)
                + nbytes(tb * in_p, mm_dtype) + nbytes(tb * out_p, f32))
    vmem = int(min(max(vmem + (4 << 20), 8 << 20), 48 << 20))  # fits v7x's 64 MiB VMEM

    out = pl.pallas_call(
        mlp_kernel,
        out_shape=jax.ShapeDtypeStruct((b_p, out_p), jnp.float32),
        grid=grid,
        in_specs=[
            pl.BlockSpec((tb, in_p), lambda i: (i, 0)),       # x tile (pipelined)
            pl.BlockSpec((in_p, hid_p), lambda i: (0, 0)),    # W1 (VMEM-resident)
            pl.BlockSpec((1, hid_p), lambda i: (0, 0)),       # b1 (VMEM-resident)
            pl.BlockSpec((hid_p, out_p), lambda i: (0, 0)),   # W2 (VMEM-resident)
            pl.BlockSpec((1, out_p), lambda i: (0, 0)),       # b2 (VMEM-resident)
        ],
        out_specs=pl.BlockSpec((tb, out_p), lambda i: (i, 0)),
        compiler_params=pltpu.CompilerParams(
            dimension_semantics=("parallel",),
            vmem_limit_bytes=vmem),
    )(x_p, w1_p, b1_p, w2_p, b2_p)

    return out[:B, :out_dim]


def init_linear_params(key, fan_in, fan_out):
    """Deterministic init matching nn.Linear's U(-1/sqrt(fan_in), 1/sqrt(fan_in))."""
    kw, kb = jax.random.split(key)
    bound = 1.0 / math.sqrt(fan_in)
    w = jax.random.uniform(kw, (fan_in, fan_out), jnp.float32, -bound, bound)
    b = jax.random.uniform(kb, (1, fan_out), jnp.float32, -bound, bound)
    return w, b


def reference_forward(x, w1, b1, w2, b2):
    h = x @ w1 + b1
    h = 0.5 * h * (1.0 + jax.lax.erf(h / jnp.sqrt(2.0)))
    z = h @ w2 + b2
    return jax.nn.softmax(z, axis=1)


if __name__ == "__main__":
    # TODO(synk): criterion / optimizer / backward() are training-only (autograd +
    # optimizer step) and are not part of the forward pass, so they are not ported.
    in_dim, hid_dim, out_dim = 16, 32, 8
    batch = 8

    key = jax.random.PRNGKey(0)
    kx, k1, k2 = jax.random.split(key, 3)

    x = jax.random.normal(kx, (batch, in_dim), dtype=jnp.float32)
    w1, b1 = init_linear_params(k1, in_dim, hid_dim)
    w2, b2 = init_linear_params(k2, hid_dim, out_dim)

    out = jax.block_until_ready(mlp_forward(x, w1, b1, w2, b2))
    ref = reference_forward(x, w1, b1, w2, b2)

    assert out.shape == (batch, out_dim)
    # Tolerance accommodates the EUP approx-reciprocal softmax denominator.
    assert jnp.allclose(out, ref, atol=5e-3, rtol=5e-3), "mismatch vs JAX reference"
    # Softmax rows should still sum to ~1.
    assert jnp.allclose(jnp.sum(out, axis=1), 1.0, atol=5e-3), "softmax rows not normalized"

    print("KERNEL_OK")
</pallas_src>

<mosaic_0001>
module attributes {stable_mosaic.version = 11 : i64} {
  func.func @mlp_kernel(%arg0: i32, %arg1: memref<8x128xf32, #tpu.memory_space<vmem>>, %arg2: memref<128x128xf32, #tpu.memory_space<vmem>>, %arg3: memref<1x128xf32, #tpu.memory_space<vmem>>, %arg4: memref<128x128xf32, #tpu.memory_space<vmem>>, %arg5: memref<1x128xf32, #tpu.memory_space<vmem>>, %arg6: memref<8x128xf32, #tpu.memory_space<vmem>>) attributes {dimension_semantics = [#tpu.dimension_semantics<parallel>], iteration_bounds = array<i64: 1>, scalar_prefetch = 0 : i64, scratch_operands = 0 : i64, tpu.core_type = #tpu.core_type<tc>, window_params = [{transform_indices = @transform_0, window_bounds = array<i64: 8, 128>}, {pipeline_mode = #tpu.pipeline_mode<synchronous>, transform_indices = @transform_1, window_bounds = array<i64: 128, 128>}, {pipeline_mode = #tpu.pipeline_mode<synchronous>, transform_indices = @transform_2, window_bounds = array<i64: 1, 128>}, {pipeline_mode = #tpu.pipeline_mode<synchronous>, transform_indices = @transform_3, window_bounds = array<i64: 128, 128>}, {pipeline_mode = #tpu.pipeline_mode<synchronous>, transform_indices = @transform_4, window_bounds = array<i64: 1, 128>}, {transform_indices = @transform_5, window_bounds = array<i64: 8, 128>}]} {
    %c0 = arith.constant 0 : index
    %c0_0 = arith.constant 0 : index
    %0 = vector.load %arg1[%c0, %c0_0] : memref<8x128xf32, #tpu.memory_space<vmem>>, vector<8x128xf32>
    %c0_1 = arith.constant 0 : index
    %c0_2 = arith.constant 0 : index
    %1 = vector.load %arg2[%c0_1, %c0_2] : memref<128x128xf32, #tpu.memory_space<vmem>>, vector<128x128xf32>
    %cst = arith.constant dense<0.000000e+00> : vector<8x128xf32>
    %2 = tpu.matmul %0, %1, %cst {dimension_numbers = #tpu.dot_dimension_numbers<[1], [0], [0], [1], [0, 0, 1, 1], [], []>} : vector<8x128xf32>, vector<128x128xf32>, vector<8x128xf32> -> vector<8x128xf32>
    %c0_3 = arith.constant 0 : index
    %c0_4 = arith.constant 0 : index
    %3 = vector.load %arg3[%c0_3, %c0_4] : memref<1x128xf32, #tpu.memory_space<vmem>>, vector<1x128xf32>
    %4 = vector.broadcast %3 : vector<1x128xf32> to vector<8x128xf32>
    %5 = arith.addf %2, %4 : vector<8x128xf32>
    %cst_5 = arith.constant 5.000000e-01 : f32
    %6 = vector.broadcast %cst_5 : f32 to vector<8x128xf32>
    %7 = arith.mulf %6, %5 : vector<8x128xf32>
    %cst_6 = arith.constant 0.707106769 : f32
    %8 = vector.broadcast %cst_6 : f32 to vector<8x128xf32>
    %9 = arith.mulf %5, %8 : vector<8x128xf32>
    %10 = math.erf %9 : vector<8x128xf32>
    %cst_7 = arith.constant 1.000000e+00 : f32
    %11 = vector.broadcast %cst_7 : f32 to vector<8x128xf32>
    %12 = arith.addf %11, %10 : vector<8x128xf32>
    %13 = arith.mulf %7, %12 : vector<8x128xf32>
    %c0_8 = arith.constant 0 : index
    %c0_9 = arith.constant 0 : index
    %14 = vector.load %arg4[%c0_8, %c0_9] : memref<128x128xf32, #tpu.memory_space<vmem>>, vector<128x128xf32>
    %cst_10 = arith.constant dense<0.000000e+00> : vector<8x128xf32>
    %15 = tpu.matmul %13, %14, %cst_10 {dimension_numbers = #tpu.dot_dimension_numbers<[1], [0], [0], [1], [0, 0, 1, 1], [], []>} : vector<8x128xf32>, vector<128x128xf32>, vector<8x128xf32> -> vector<8x128xf32>
    %c0_11 = arith.constant 0 : index
    %c0_12 = arith.constant 0 : index
    %16 = vector.load %arg5[%c0_11, %c0_12] : memref<1x128xf32, #tpu.memory_space<vmem>>, vector<1x128xf32>
    %17 = vector.broadcast %16 : vector<1x128xf32> to vector<8x128xf32>
    %18 = arith.addf %15, %17 : vector<8x128xf32>
    %cst_13 = arith.constant dense<0xFF800000> : vector<8xf32>
    %19 = vector.multi_reduction <maximumf>, %18, %cst_13 [1] : vector<8x128xf32> to vector<8xf32>
    %20 = vector.shape_cast %19 : vector<8xf32> to vector<8x1xf32>
    %21 = vector.broadcast %20 : vector<8x1xf32> to vector<8x128xf32>
    %22 = arith.subf %18, %21 : vector<8x128xf32>
    %23 = math.exp %22 : vector<8x128xf32>
    %cst_14 = arith.constant dense<0.000000e+00> : vector<8xf32>
    %24 = vector.multi_reduction <add>, %23, %cst_14 [1] : vector<8x128xf32> to vector<8xf32>
    %25 = vector.shape_cast %24 : vector<8xf32> to vector<8x1xf32>
    %26 = tpu.reciprocal %25 {approx = true} : vector<8x1xf32> -> vector<8x1xf32>
    %27 = vector.broadcast %26 : vector<8x1xf32> to vector<8x128xf32>
    %28 = arith.mulf %23, %27 : vector<8x128xf32>
    %c0_15 = arith.constant 0 : index
    %c0_16 = arith.constant 0 : index
    %29 = vector.load %arg6[%c0_15, %c0_16] : memref<8x128xf32, #tpu.memory_space<vmem>>, vector<8x128xf32>
    tpu.vector_store %arg6[%c0_15, %c0_16], %28 {strides = array<i32>} : memref<8x128xf32, #tpu.memory_space<vmem>>, vector<8x128xf32>,
    return
  }
  func.func @transform_0(%arg0: i32) -> (i32, i32) {
    %c0_i32 = arith.constant 0 : i32
    %c0_i32_0 = arith.constant 0 : i32
    return %arg0, %c0_i32 : i32, i32
  }
  func.func @transform_1(%arg0: i32) -> (i32, i32) {
    %c0_i32 = arith.constant 0 : i32
    %c0_i32_0 = arith.constant 0 : i32
    %c0_i32_1 = arith.constant 0 : i32
    return %c0_i32, %c0_i32_0 : i32, i32
  }
  func.func @transform_2(%arg0: i32) -> (i32, i32) {
    %c0_i32 = arith.constant 0 : i32
    %c0_i32_0 = arith.constant 0 : i32
    %c0_i32_1 = arith.constant 0 : i32
    return %c0_i32, %c0_i32_0 : i32, i32
  }
  func.func @transform_3(%arg0: i32) -> (i32, i32) {
    %c0_i32 = arith.constant 0 : i32
    %c0_i32_0 = arith.constant 0 : i32
    %c0_i32_1 = arith.constant 0 : i32
    return %c0_i32, %c0_i32_0 : i32, i32
  }
  func.func @transform_4(%arg0: i32) -> (i32, i32) {
    %c0_i32 = arith.constant 0 : i32
    %c0_i32_0 = arith.constant 0 : i32
    %c0_i32_1 = arith.constant 0 : i32
    return %c0_i32, %c0_i32_0 : i32, i32
  }
  func.func @transform_5(%arg0: i32) -> (i32, i32) {
    %c0_i32 = arith.constant 0 : i32
    %c0_i32_0 = arith.constant 0 : i32
    return %arg0, %c0_i32 : i32, i32
  }
}

</mosaic_0001>

<llo_original>
// kernel: tpu_custom_call.1
$region0: #{tpu_custom_call.1}
  #allocation0 [shape = 'u32[]', space=smem, size = 0x4, offset = 0x4, fixed_abs, tag = 'smem constant byte address 0x4 - core index']
  #allocation1 [shape = 'u32[72,128]{1,0:T(1,128)}', space=vmem, size = 0x9000, scoped, tag = 'internal scratch']
  %s0 = inlined_call_operand.hbm [shape: f32[8,128], index: 0, kind: input, shape index: {}]
  %s1 = inlined_call_operand.hbm [shape: f32[128,128], index: 1, kind: input, shape index: {}]
  %s2 = inlined_call_operand.vmem [shape: f32[1,128], index: 2, kind: input, shape index: {}]
  %s3 = inlined_call_operand.hbm [shape: f32[128,128], index: 3, kind: input, shape index: {}]
  %s4 = inlined_call_operand.vmem [shape: f32[1,128], index: 4, kind: input, shape index: {}]
  %s5 = inlined_call_operand.hbm [shape: f32[8,128], index: 5, kind: output, shape index: {}]
  %s6 = sld [smem:[#allocation0]]
  $region42: #{tpu_custom_call.1} parent=0
    _
  %s8 = ssub.s32 1, %s6
  %s9 = scalar_select 0, %s8, %s6
  $region1: #{tpu_custom_call.1} parent=0
    #allocation2 [shape = 'u8[4096]{0}', space=vmem, size = 0x1000, scoped, tag = 'input window, operand 0, single buffered']
    #allocation3 [shape = 's32[1]{0}', space=sflag, size = 0x4, scoped, tag = 'scoped memory for tpu_custom_call.1']
    #allocation4 [shape = 's32[1]{0}', space=sflag, size = 0x4, scoped, tag = 'scoped memory for tpu_custom_call.1']
    #allocation5 [shape = 'u8[65536]{0}', space=vmem, size = 0x10000, scoped, tag = 'input window, operand 1, single buffered']
    #allocation6 [shape = 's32[1]{0}', space=sflag, size = 0x4, scoped, tag = 'scoped memory for tpu_custom_call.1']
    #allocation7 [shape = 'u8[65536]{0}', space=vmem, size = 0x10000, scoped, tag = 'input window, operand 3, single buffered']
    #allocation8 [shape = 'u8[4096]{0}', space=vmem, size = 0x1000, scoped, tag = 'output window, operand 0, single buffered']
    %10 = vsyncpa [#allocation3], 0
    %11 = vsyncpa [#allocation6], 0
    %12 = vsyncpa [#allocation4], 0
    // Predicated region
    $region2: #{tpu_custom_call.1} parent=1 // pred_check
      _
    $region3: #{tpu_custom_call.1} parent=1 // pred_check_branch
      %14 = sbr.rel (0) target = $region5
    $region4: #{tpu_custom_call.1} parent=1 // pred_region
      %16 = vsyncadd [#allocation3], 0
      %s18 = sshll.u32 %s0, 4
      %s19 = int_to_ptr.hbm [resolvable:$true] %s18
      %s20 = sshll.u32 [#allocation2], 4
      %s21 = int_to_ptr.vmem [resolvable:$true] %s20
      %23 = dma.hbm_to_vmem [thread:$0]  %s19, 128, %s21, [#allocation3]
    $region5: #{tpu_custom_call.1} parent=1 // pred_fallthru
      _
    // Predicated region
    $region6: #{tpu_custom_call.1} parent=1 // pred_check
      _
    $region7: #{tpu_custom_call.1} parent=1 // pred_check_branch
      %25 = sbr.rel (0) target = $region9
    $region8: #{tpu_custom_call.1} parent=1 // pred_region
      %27 = vsyncadd [#allocation6], 0
      %s28 = sshll.u32 %s1, 4
      %s29 = int_to_ptr.hbm [resolvable:$true] %s28
      %s30 = sshll.u32 [#allocation5], 4
      %s31 = int_to_ptr.vmem [resolvable:$true] %s30
      %36 = dma.hbm_to_vmem [thread:$0]  %s29, 2048, %s31, [#allocation6], 128, 128, 8
    $region9: #{tpu_custom_call.1} parent=1 // pred_fallthru
      _
    // Predicated region
    $region10: #{tpu_custom_call.1} parent=1 // pred_check
      _
    $region11: #{tpu_custom_call.1} parent=1 // pred_check_branch
      %38 = sbr.rel (0) target = $region13
    $region12: #{tpu_custom_call.1} parent=1 // pred_region
      _
    $region13: #{tpu_custom_call.1} parent=1 // pred_fallthru
      _
    // Predicated region
    $region14: #{tpu_custom_call.1} parent=1 // pred_check
      _
    $region15: #{tpu_custom_call.1} parent=1 // pred_check_branch
      %40 = sbr.rel (0) target = $region17
    $region16: #{tpu_custom_call.1} parent=1 // pred_region
      %42 = vsyncadd [#allocation6], 0
      %s43 = sshll.u32 %s3, 4
      %s44 = int_to_ptr.hbm [resolvable:$true] %s43
      %s45 = sshll.u32 [#allocation7], 4
      %s46 = int_to_ptr.vmem [resolvable:$true] %s45
      %51 = dma.hbm_to_vmem [thread:$0]  %s44, 2048, %s46, [#allocation6], 128, 128, 8
    $region17: #{tpu_custom_call.1} parent=1 // pred_fallthru
      _
    // Predicated region
    $region18: #{tpu_custom_call.1} parent=1 // pred_check
      _
    $region19: #{tpu_custom_call.1} parent=1 // pred_check_branch
      %53 = sbr.rel (0) target = $region21
    $region20: #{tpu_custom_call.1} parent=1 // pred_region
      _
    $region21: #{tpu_custom_call.1} parent=1 // pred_fallthru
      _
    // Predicated region
    $region22: #{tpu_custom_call.1} parent=1 // pred_check
      _
    $region23: #{tpu_custom_call.1} parent=1 // pred_check_branch
      %55 = sbr.rel (0) target = $region25
    $region24: #{tpu_custom_call.1} parent=1 // pred_region
      %57 = dma.done [#allocation3], 128
    $region25: #{tpu_custom_call.1} parent=1 // pred_fallthru
      _
    // Predicated region
    $region26: #{tpu_custom_call.1} parent=1 // pred_check
      _
    $region27: #{tpu_custom_call.1} parent=1 // pred_check_branch
      %59 = sbr.rel (0) target = $region29
    $region28: #{tpu_custom_call.1} parent=1 // pred_region
      %61 = dma.done [#allocation6], 2048
    $region29: #{tpu_custom_call.1} parent=1 // pred_fallthru
      _
    // Predicated region
    $region30: #{tpu_custom_call.1} parent=1 // pred_check
      _
    $region31: #{tpu_custom_call.1} parent=1 // pred_check_branch
      %63 = sbr.rel (0) target = $region33
    $region32: #{tpu_custom_call.1} parent=1 // pred_region
      %65 = dma.done [#allocation6], 2048
    $region33: #{tpu_custom_call.1} parent=1 // pred_fallthru
      _
    %v66 = vld [vmem:[#allocation2] sm:$0xff]
    %v67 = vld [vmem:[#allocation5] sm:$0xff]
    %v68 = vld [vmem:[#allocation5 + $0x8] sm:$0xff]
    %v69 = vld [vmem:[#allocation5 + $0x10] sm:$0xff]
    %v70 = vld [vmem:[#allocation5 + $0x18] sm:$0xff]
    %v71 = vld [vmem:[#allocation5 + $0x20] sm:$0xff]
    %v72 = vld [vmem:[#allocation5 + $0x28] sm:$0xff]
    %v73 = vld [vmem:[#allocation5 + $0x30] sm:$0xff]
    %v74 = vld [vmem:[#allocation5 + $0x38] sm:$0xff]
    %v75 = vld [vmem:[#allocation5 + $0x40] sm:$0xff]
    %v76 = vld [vmem:[#allocation5 + $0x48] sm:$0xff]
    %v77 = vld [vmem:[#allocation5 + $0x50] sm:$0xff]
    %v78 = vld [vmem:[#allocation5 + $0x58] sm:$0xff]
    %v79 = vld [vmem:[#allocation5 + $0x60] sm:$0xff]
    %v80 = vld [vmem:[#allocation5 + $0x68] sm:$0xff]
    %v81 = vld [vmem:[#allocation5 + $0x70] sm:$0xff]
    %v82 = vld [vmem:[#allocation5 + $0x78] sm:$0xff]
    %v83 = vld [vmem:[%s2] sm:$0x1]
    %v85 = vperm.slane %v83, 0
    %87 = vmatpush.msra.mxu0 %v82
    %88 = vmatpush.msra.mxu0 %v81
    %89 = vmatpush.msra.mxu0 %v80
    %90 = vmatpush.msra.mxu0 %v79
    %91 = vmatpush.msra.mxu0 %v78
    %92 = vmatpush.msra.mxu0 %v77
    %93 = vmatpush.msra.mxu0 %v76
    %94 = vmatpush.msra.mxu0 %v75
    %95 = vmatpush.msra.mxu0 %v74
    %96 = vmatpush.msra.mxu0 %v73
    %97 = vmatpush.msra.mxu0 %v72
    %98 = vmatpush.msra.mxu0 %v71
    %99 = vmatpush.msra.mxu0 %v70
    %100 = vmatpush.msra.mxu0 %v69
    %101 = vmatpush.msra.mxu0 %v68
    %102 = vmatpush.msra.mxu0 %v67
    %103 = vmatmul.f32.gmra.mxu0 %v66
    %v104 = vpop.f32.mrf.mxu0
    %v105 = vadd.f32 %v85, %v104
    %106 = vdwg.mxu0
    %v107 = vmul.f32 %v105, 0.5
    %v108 = vmul.f32 %v105, 0.70710677
    %v109 = vmul.f32 %v108, %v108
    %v110 = vmin.f32 16.0, %v109
    %v111 = vmul.f32 %v110, 2.1237322e-06
    %v112 = vadd.f32 %v111, 0.00028619796
    %v113 = vmul.f32 %v110, %v112
    %v114 = vadd.f32 %v113, 0.0036580483
    %v115 = vmul.f32 %v110, %v114
    %v116 = vadd.f32 %v115, 0.05243302
    %v117 = vmul.f32 %v110, %v116
    %v118 = vadd.f32 %v117, 0.18741608
    %v119 = vmul.f32 %v110, %v118
    %v120 = vadd.f32 %v119, 1.1283791
    %v121 = vmul.f32 %v108, %v120
    %v122 = vmul.f32 %v110, 3.8918573e-05
    %v123 = vadd.f32 %v122, 0.001143296
    %v124 = vmul.f32 %v110, %v123
    %v125 = vadd.f32 %v124, 0.014752088
    %v126 = vmul.f32 %v110, %v125
    %v127 = vadd.f32 %v126, 0.112945676
    %v128 = vmul.f32 %v110, %v127
    %v129 = vadd.f32 %v128, 0.4994258
    %v130 = vmul.f32 %v110, %v129
    %v131 = vadd.f32 %v130, 1.0
    %v132 = vrcp.pop %v131
    %v133 = vmul.f32 %v131, %v132
    %v134 = vsub.f32 1.0, %v133
    %v135 = vmul.f32 %v132, %v134
    %v136 = vadd.f32 %v132, %v135
    %vm137 = vweird.f32 %v131
    %vm138 = vweird.f32 %v132
    %vm139 = vmor %vm137, %vm138
    %v140 = vsel %vm139, %v132, %v136
    %v141 = vand.u32 2147483647, %v131
    %vm142 = vcmp.eq.f32.partialorder %v141, 8.507059e+37
    %v143 = vand.u32 %v131, 2147483648
    %v144 = vor.u32 1.1754944e-38, %v143
    %v145 = vsel %vm142, %v144, %v140
    %v146 = vmul.f32 %v121, %v145
    %v147 = vmin.f32 %v146, 1.0
    %v148 = vmax.f32 %v147, -1.0
    %v149 = vadd.f32 %v148, 1.0
    %v150 = vmul.f32 %v107, %v149
    %v151 = vld [vmem:[#allocation7] sm:$0xff]
    %v152 = vld [vmem:[#allocation7 + $0x8] sm:$0xff]
    %v153 = vld [vmem:[#allocation7 + $0x10] sm:$0xff]
    %v154 = vld [vmem:[#allocation7 + $0x18] sm:$0xff]
    %v155 = vld [vmem:[#allocation7 + $0x20] sm:$0xff]
    %v156 = vld [vmem:[#allocation7 + $0x28] sm:$0xff]
    %v157 = vld [vmem:[#allocation7 + $0x30] sm:$0xff]
    %v158 = vld [vmem:[#allocation7 + $0x38] sm:$0xff]
    %v159 = vld [vmem:[#allocation7 + $0x40] sm:$0xff]
    %v160 = vld [vmem:[#allocation7 + $0x48] sm:$0xff]
    %v161 = vld [vmem:[#allocation7 + $0x50] sm:$0xff]
    %v162 = vld [vmem:[#allocation7 + $0x58] sm:$0xff]
    %v163 = vld [vmem:[#allocation7 + $0x60] sm:$0xff]
    %v164 = vld [vmem:[#allocation7 + $0x68] sm:$0xff]
    %v165 = vld [vmem:[#allocation7 + $0x70] sm:$0xff]
    %v166 = vld [vmem:[#allocation7 + $0x78] sm:$0xff]
    %v167 = vld [vmem:[%s4] sm:$0x1]
    %v169 = vperm.slane %v167, 0
    %171 = vmatpush.msra.mxu0 %v166
    %172 = vmatpush.msra.mxu0 %v165
    %173 = vmatpush.msra.mxu0 %v164
    %174 = vmatpush.msra.mxu0 %v163
    %175 = vmatpush.msra.mxu0 %v162
    %176 = vmatpush.msra.mxu0 %v161
    %177 = vmatpush.msra.mxu0 %v160
    %178 = vmatpush.msra.mxu0 %v159
    %179 = vmatpush.msra.mxu0 %v158
    %180 = vmatpush.msra.mxu0 %v157
    %181 = vmatpush.msra.mxu0 %v156
    %182 = vmatpush.msra.mxu0 %v155
    %183 = vmatpush.msra.mxu0 %v154
    %184 = vmatpush.msra.mxu0 %v153
    %185 = vmatpush.msra.mxu0 %v152
    %186 = vmatpush.msra.mxu0 %v151
    %187 = vmatmul.f32.gmra.mxu0 %v150
    %v188 = vpop.f32.mrf.mxu0
    %v189 = vadd.f32 %v169, %v188
    %190 = vdwg.mxu0
    %191 = vmax.xlane.f32.xlu0 %v189
    %v192 = vpop.xlane.xlu0 %191
    %v193 = vsub.f32 %v189, %v192
    %v194 = vmul.f32 %v193, 1.442695
    %v195 = vpow.pop %v194
    %196 = vadd.xlane.f32.xlu0 %v195
    %v197 = vpop.xlane.xlu0 %196
    %v198 = vrcp.pop %v197
    %v199 = vmul.f32 %v195, %v198
    %200 = vst [vmem:[#allocation8] sm:$0xff] %v199
    // Predicated region
    $region34: #{tpu_custom_call.1} parent=1 // pred_check
      _
    $region35: #{tpu_custom_call.1} parent=1 // pred_check_branch
      %202 = sbr.rel (0) target = $region37
    $region36: #{tpu_custom_call.1} parent=1 // pred_region
      %204 = vsyncadd [#allocation4], 0
      %s206 = sshll.u32 [#allocation8], 4
      %s207 = int_to_ptr.vmem [resolvable:$true] %s206
      %s208 = sshll.u32 %s5, 4
      %s209 = int_to_ptr.hbm [resolvable:$true] %s208
      %211 = dma.vmem_to_hbm [thread:$0]  %s207, 128, %s209, [#allocation4]
    $region37: #{tpu_custom_call.1} parent=1 // pred_fallthru
      _
    // Predicated region
    $region38: #{tpu_custom_call.1} parent=1 // pred_check
      _
    $region39: #{tpu_custom_call.1} parent=1 // pred_check_branch
      %213 = sbr.rel (0) target = $region41
    $region40: #{tpu_custom_call.1} parent=1 // pred_region
      %215 = dma.done [#allocation4], 128
    $region41: #{tpu_custom_call.1} parent=1 // pred_fallthru
      _
    %216 = vsyncpa [#allocation3], 1
    %217 = vsyncpa [#allocation6], 1
    %218 = vsyncpa [#allocation4], 1

</llo_original>
